<compile_context>
chip_gen: v7x
topology: tpu7x:2x2x1
jax: 0.10.0
libtpu: 0.0.40
codegen_flags: <defaults>
</compile_context>

<pallas_src>
import functools

import jax
import jax.numpy as jnp
from jax.experimental import pallas as pl
from jax.experimental.pallas import tpu as pltpu


# ---------------------------------------------------------------------------
# Pallas kernel: [split WN-Linear, LN, ReLU] -> [WN-Linear, LN, ReLU] -> WN-(hidden->1)
# Weights arrive pre-transposed (in, out) with the weight-norm scale already folded in.
# ---------------------------------------------------------------------------
def critic_kernel(state_ref, action_ref,
                  w1_ref, vec1_ref,
                  w2_ref, vec2_ref,
                  vf_ref, bf_ref,
                  out_ref, *, s_pad):
    eps = 1e-5
    f32 = jnp.float32
    cdt = w1_ref.dtype                     # MXU operand dtype (bf16 default, f32 exact path)

    def layer_norm(h, gamma, beta):
        # one-pass variance: E[x^2] - mean^2 (values are O(1) post weight-norm -> safe)
        mu = jnp.mean(h, axis=-1, keepdims=True)
        ms = jnp.mean(h * h, axis=-1, keepdims=True)
        var = jnp.maximum(ms - mu * mu, 0.0)
        return (h - mu) * jax.lax.rsqrt(var + eps) * gamma + beta

    state = state_ref[...].astype(cdt)      # (TB, S_pad)
    action = action_ref[...].astype(cdt)    # (TB, A_pad)

    # ---- hidden layer 1: split matmul (no concat); slices are sublane-aligned (s_pad % 8 == 0)
    w1 = w1_ref[...]                        # (S_pad + A_pad, H1), weight-norm already applied
    vec1 = vec1_ref[...].astype(f32)        # (3, H1): bias, gamma, beta
    h = (jnp.dot(state,  w1[:s_pad, :], preferred_element_type=f32) +
         jnp.dot(action, w1[s_pad:, :], preferred_element_type=f32))
    h = layer_norm(h + vec1[0:1, :], vec1[1:2, :], vec1[2:3, :])
    h = jnp.maximum(h, 0.0)

    # ---- hidden layer 2
    w2 = w2_ref[...]                        # (H1, H2)
    vec2 = vec2_ref[...].astype(f32)        # (3, H2)
    h = jnp.dot(h.astype(cdt), w2, preferred_element_type=f32)
    h = layer_norm(h + vec2[0:1, :], vec2[1:2, :], vec2[2:3, :])
    h = jnp.maximum(h, 0.0)

    # ---- output layer (hidden -> 1), lane-dense:
    # q_row = vf (1,H2) . h^T (H2,TB)  done as dot_general contracting the last dims
    # of both operands (MXU trans_b) -> (1, TB) row, unmasked lane-dense store.
    vf = vf_ref[...]                        # (1, H2), already g * V / ||V||
    q = jax.lax.dot_general(vf, h.astype(cdt),
                            dimension_numbers=(((1,), (1,)), ((), ())),
                            preferred_element_type=f32)          # (1, TB)
    out_ref[...] = (q + bf_ref[0]).astype(out_ref.dtype)


# ---------------------------------------------------------------------------
# Parameter packing (done once, outside the kernel): fold weight-norm into the
# pre-transposed weights, stack small vectors, pad to sublane boundaries.
# ---------------------------------------------------------------------------
def _round_up(x, m):
    return ((x + m - 1) // m) * m


def _pack_params(params, state_size, action_size, compute_dtype):
    (v1, g1, b1, ga1, be1,
     v2, g2, b2, ga2, be2,
     vf, gf, bf) = params
    S, A = state_size, action_size
    S_pad, A_pad = _round_up(S, 8), _round_up(A, 8)
    H1 = v1.shape[0]
    H2 = v2.shape[0]

    def wn_weight_t(v, g):
        # torch weight_norm (dim=0): W = g * V / ||V||_row ; return W^T with shape (in, out)
        return (v * (g.T / jnp.linalg.norm(v, axis=1, keepdims=True))).T

    w1t = wn_weight_t(v1, g1)                                   # (S+A, H1)
    # Scatter state rows into [0:S] and action rows into [S_pad:S_pad+A]; padding rows
    # are zero (and the matching padded activation columns are zero), so they add nothing.
    w1t_p = jnp.zeros((S_pad + A_pad, H1), jnp.float32)
    w1t_p = w1t_p.at[:S, :].set(w1t[:S, :])
    w1t_p = w1t_p.at[S_pad:S_pad + A, :].set(w1t[S:, :])

    w2t = wn_weight_t(v2, g2)                                   # (H1, H2)
    vf_s = vf * (gf / jnp.linalg.norm(vf, axis=1, keepdims=True))  # (1, H2)

    vec1 = jnp.concatenate([b1, ga1, be1], axis=0).astype(jnp.float32)  # (3, H1)
    vec2 = jnp.concatenate([b2, ga2, be2], axis=0).astype(jnp.float32)  # (3, H2)
    fin = bf.reshape(-1).astype(jnp.float32)                            # (1,): final bias

    return (w1t_p.astype(compute_dtype), vec1,
            w2t.astype(compute_dtype), vec2,
            vf_s.astype(compute_dtype), fin, S_pad, A_pad)


def _choose_tile_b(B):
    # Full batch in one step when small; otherwise >=2 steps (v7x megacore) with large
    # lane-aligned tiles (<=2048 rows) to amortize the ~0.35us per-grid-step overhead.
    if B <= 256:
        return B
    t = min(2048, pl.cdiv(B, 2))
    return max(128, (t // 128) * 128)


# ---------------------------------------------------------------------------
# Wrapper: packs parameters, pads batch/feature dims, launches the gridded call.
# ---------------------------------------------------------------------------
def critic_forward(state, action, params, *, compute_dtype=jnp.bfloat16, tile_b=None):
    B, S = state.shape
    A = action.shape[1]
    (w1t, vec1, w2t, vec2, vf_s, fin, S_pad, A_pad) = _pack_params(
        params, S, A, compute_dtype)
    H1 = w1t.shape[1]
    H2 = w2t.shape[1]

    if tile_b is None:
        tile_b = _choose_tile_b(B)
    n_tiles = pl.cdiv(B, tile_b)
    B_pad = n_tiles * tile_b

    def pad2(x, rows, cols):
        r, c = x.shape
        if r == rows and c == cols:
            return x
        return jnp.pad(x, ((0, rows - r), (0, cols - c)))

    # Zero-pad batch rows (sliced off afterwards) and feature dims to sublane widths.
    state_p = pad2(state, B_pad, S_pad)
    action_p = pad2(action, B_pad, A_pad)

    kernel = functools.partial(critic_kernel, s_pad=S_pad)

    in_specs = [
        pl.BlockSpec((tile_b, S_pad), lambda i: (i, 0)),           # state: streamed over batch
        pl.BlockSpec((tile_b, A_pad), lambda i: (i, 0)),           # action: streamed over batch
        pl.BlockSpec((S_pad + A_pad, H1), lambda i: (0, 0)),       # W1^T (wn folded): resident
        pl.BlockSpec((3, H1), lambda i: (0, 0)),                   # b1/gamma1/beta1: resident
        pl.BlockSpec((H1, H2), lambda i: (0, 0)),                  # W2^T (wn folded): resident
        pl.BlockSpec((3, H2), lambda i: (0, 0)),                   # b2/gamma2/beta2: resident
        pl.BlockSpec((1, H2), lambda i: (0, 0)),                   # W_f row (wn folded): resident
        pl.BlockSpec(memory_space=pltpu.MemorySpace.SMEM),         # [bf] scalar
    ]
    # Lane-dense output: one (1, tile_b) row per grid step.
    out_specs = pl.BlockSpec((1, tile_b), lambda i: (0, i))

    wbytes = jnp.dtype(compute_dtype).itemsize
    flops = 2 * B_pad * ((S_pad + A_pad) * H1 + H1 * H2 + H2)
    bytes_accessed = (B_pad * (S_pad + A_pad) * state.dtype.itemsize   # inputs
                      + B_pad * 4                                      # output
                      + ((S_pad + A_pad) * H1 + H1 * H2 + H2) * wbytes # weights
                      + 3 * (H1 + H2) * 4)                             # LN/bias vectors
    cost = pl.CostEstimate(flops=flops, transcendentals=2 * B_pad,
                           bytes_accessed=bytes_accessed)

    # Rough VMEM budget (double-buffered streams + resident weights + live intermediates).
    # TODO(synk): for very large hidden sizes, single-buffer the resident weights
    # (pipeline_mode=pl.Buffered(1)) to stay inside v7x's 64 MiB VMEM.
    stream = 2 * 2 * tile_b * (S_pad + A_pad) * 4 + 2 * tile_b * 4
    weights = 2 * ((S_pad + A_pad) * H1 + H1 * H2 + H2) * wbytes + 2 * 3 * (H1 + H2) * 4
    live = 4 * tile_b * max(H1, H2) * 4
    vmem_limit = int(min(max(32 << 20, 2 * (stream + weights + live)), 64 << 20))

    out = pl.pallas_call(
        kernel,
        out_shape=jax.ShapeDtypeStruct((1, B_pad), jnp.float32),
        grid=(n_tiles,),
        in_specs=in_specs,
        out_specs=out_specs,
        compiler_params=pltpu.CompilerParams(
            dimension_semantics=("parallel",),
            vmem_limit_bytes=vmem_limit),
        cost_estimate=cost,
    )(state_p, action_p, w1t, vec1, w2t, vec2, vf_s, fin)

    return out.reshape(-1)[:B].reshape(B, 1)


# ---------------------------------------------------------------------------
# Pure-JAX reference (mirrors the PyTorch module) for a correctness check.
# ---------------------------------------------------------------------------
def critic_reference(state, action, params):
    (v1, g1, b1, ga1, be1,
     v2, g2, b2, ga2, be2,
     vf, gf, bf) = params
    eps = 1e-5

    def wn_linear(x, v, g, b):
        w = v * (g.T / jnp.linalg.norm(v, axis=1, keepdims=True))
        return x @ w.T + b

    def layer_norm(h, gamma, beta):
        mu = jnp.mean(h, axis=-1, keepdims=True)
        var = jnp.mean((h - mu) ** 2, axis=-1, keepdims=True)
        return (h - mu) / jnp.sqrt(var + eps) * gamma + beta

    x = jnp.concatenate([state, action], axis=-1)
    h = jnp.maximum(layer_norm(wn_linear(x, v1, g1, b1), ga1, be1), 0.0)
    h = jnp.maximum(layer_norm(wn_linear(h, v2, g2, b2), ga2, be2), 0.0)
    return wn_linear(h, vf, gf, bf)


# ---------------------------------------------------------------------------
# Deterministic parameter init (shapes follow CriticNetwork.__init__, torch layout)
# ---------------------------------------------------------------------------
def init_params(key, state_size, action_size, hidden_layers):
    dims = [state_size + action_size] + list(hidden_layers)
    params = []
    for i in range(len(hidden_layers)):
        fan_in, fan_out = dims[i], dims[i + 1]
        key, k_v, k_b = jax.random.split(key, 3)
        bound = 1.0 / jnp.sqrt(fan_in)
        v = jax.random.uniform(k_v, (fan_out, fan_in), jnp.float32, -bound, bound)
        g = jnp.linalg.norm(v, axis=1, keepdims=True).T          # (1, fan_out) -> W == v at init
        b = jax.random.uniform(k_b, (1, fan_out), jnp.float32, -bound, bound)
        gamma = jnp.ones((1, fan_out), jnp.float32)               # LayerNorm init
        beta = jnp.zeros((1, fan_out), jnp.float32)
        params += [v, g, b, gamma, beta]
    # final Linear(hidden_last, 1)
    fan_in = dims[-1]
    key, k_v, k_b = jax.random.split(key, 3)
    bound = 1.0 / jnp.sqrt(fan_in)
    vf = jax.random.uniform(k_v, (1, fan_in), jnp.float32, -bound, bound)
    gf = jnp.linalg.norm(vf, axis=1, keepdims=True).T             # (1, 1)
    bf = jax.random.uniform(k_b, (1, 1), jnp.float32, -bound, bound)
    params += [vf, gf, bf]
    return tuple(params)


if __name__ == "__main__":
    # Small shapes consistent with the module's forward.
    batch = 8
    state_size = 12
    action_size = 4
    hidden_layers = (32, 32)    # layer_activations = (ReLU, ReLU)
    # TODO(synk): kernel is specialized to 2 hidden layers + ReLU; variable-depth / arbitrary
    # activation tuples would need kernel regeneration per config.

    key = jax.random.PRNGKey(0)
    key, k_s, k_a, k_p = jax.random.split(key, 4)
    state = jax.random.normal(k_s, (batch, state_size), jnp.float32)
    action = jax.random.normal(k_a, (batch, action_size), jnp.float32)
    params = init_params(k_p, state_size, action_size, hidden_layers)

    ref = critic_reference(state, action, params)

    # Exact path (f32 MXU operands): tight tolerance against the f32 reference.
    out_f32 = jax.block_until_ready(
        critic_forward(state, action, params, compute_dtype=jnp.float32))
    assert out_f32.shape == (batch, 1)
    assert jnp.allclose(out_f32, ref, atol=1e-4, rtol=1e-4), (out_f32, ref)

    # Default fast path (bf16 MXU operands, f32 accumulation / LayerNorm): bf16 tolerance.
    out_bf16 = jax.block_until_ready(critic_forward(state, action, params))
    assert out_bf16.shape == (batch, 1)
    assert jnp.allclose(out_bf16, ref, atol=1e-1, rtol=5e-2), (out_bf16, ref)

    print("KERNEL_OK")
</pallas_src>

<mosaic_0001>
module attributes {stable_mosaic.version = 11 : i64} {
  func.func @critic_kernel(%arg0: i32, %arg1: memref<8x16xf32, #tpu.memory_space<vmem>>, %arg2: memref<8x8xf32, #tpu.memory_space<vmem>>, %arg3: memref<24x32xf32, #tpu.memory_space<vmem>>, %arg4: memref<3x32xf32, #tpu.memory_space<vmem>>, %arg5: memref<32x32xf32, #tpu.memory_space<vmem>>, %arg6: memref<3x32xf32, #tpu.memory_space<vmem>>, %arg7: memref<1x32xf32, #tpu.memory_space<vmem>>, %arg8: memref<1xf32, #tpu.memory_space<smem>>, %arg9: memref<1x8xf32, #tpu.memory_space<vmem>>) attributes {dimension_semantics = [#tpu.dimension_semantics<parallel>], iteration_bounds = array<i64: 1>, scalar_prefetch = 0 : i64, scratch_operands = 0 : i64, tpu.core_type = #tpu.core_type<tc>, window_params = [{transform_indices = @transform_0, window_bounds = array<i64: 8, 16>}, {transform_indices = @transform_1, window_bounds = array<i64: 8, 8>}, {pipeline_mode = #tpu.pipeline_mode<synchronous>, transform_indices = @transform_2, window_bounds = array<i64: 24, 32>}, {pipeline_mode = #tpu.pipeline_mode<synchronous>, transform_indices = @transform_3, window_bounds = array<i64: 3, 32>}, {pipeline_mode = #tpu.pipeline_mode<synchronous>, transform_indices = @transform_4, window_bounds = array<i64: 32, 32>}, {pipeline_mode = #tpu.pipeline_mode<synchronous>, transform_indices = @transform_5, window_bounds = array<i64: 3, 32>}, {pipeline_mode = #tpu.pipeline_mode<synchronous>, transform_indices = @transform_6, window_bounds = array<i64: 1, 32>}, {transform_indices = @transform_7, window_bounds = array<i64: 1>}, {transform_indices = @transform_8, window_bounds = array<i64: 1, 8>}]} {
    %c0 = arith.constant 0 : index
    %c0_0 = arith.constant 0 : index
    %0 = vector.load %arg1[%c0, %c0_0] : memref<8x16xf32, #tpu.memory_space<vmem>>, vector<8x16xf32>
    %c0_1 = arith.constant 0 : index
    %c0_2 = arith.constant 0 : index
    %1 = vector.load %arg2[%c0_1, %c0_2] : memref<8x8xf32, #tpu.memory_space<vmem>>, vector<8x8xf32>
    %c0_3 = arith.constant 0 : index
    %c0_4 = arith.constant 0 : index
    %2 = vector.load %arg3[%c0_3, %c0_4] : memref<24x32xf32, #tpu.memory_space<vmem>>, vector<24x32xf32>
    %c0_5 = arith.constant 0 : index
    %c0_6 = arith.constant 0 : index
    %3 = vector.load %arg4[%c0_5, %c0_6] : memref<3x32xf32, #tpu.memory_space<vmem>>, vector<3x32xf32>
    %4 = vector.extract_strided_slice %2 {offsets = [0, 0], sizes = [16, 32], strides = [1, 1]} : vector<24x32xf32> to vector<16x32xf32>
    %cst = arith.constant dense<0.000000e+00> : vector<8x32xf32>
    %5 = tpu.matmul %0, %4, %cst {dimension_numbers = #tpu.dot_dimension_numbers<[1], [0], [0], [1], [0, 0, 1, 1], [], []>} : vector<8x16xf32>, vector<16x32xf32>, vector<8x32xf32> -> vector<8x32xf32>
    %6 = vector.extract_strided_slice %2 {offsets = [16, 0], sizes = [8, 32], strides = [1, 1]} : vector<24x32xf32> to vector<8x32xf32>
    %cst_7 = arith.constant dense<0.000000e+00> : vector<8x32xf32>
    %7 = tpu.matmul %1, %6, %cst_7 {dimension_numbers = #tpu.dot_dimension_numbers<[1], [0], [0], [1], [0, 0, 1, 1], [], []>} : vector<8x8xf32>, vector<8x32xf32>, vector<8x32xf32> -> vector<8x32xf32>
    %8 = arith.addf %5, %7 : vector<8x32xf32>
    %9 = vector.extract_strided_slice %3 {offsets = [0, 0], sizes = [1, 32], strides = [1, 1]} : vector<3x32xf32> to vector<1x32xf32>
    %10 = vector.broadcast %9 : vector<1x32xf32> to vector<8x32xf32>
    %11 = arith.addf %8, %10 : vector<8x32xf32>
    %12 = vector.extract_strided_slice %3 {offsets = [1, 0], sizes = [1, 32], strides = [1, 1]} : vector<3x32xf32> to vector<1x32xf32>
    %13 = vector.extract_strided_slice %3 {offsets = [2, 0], sizes = [1, 32], strides = [1, 1]} : vector<3x32xf32> to vector<1x32xf32>
    %cst_8 = arith.constant dense<0.000000e+00> : vector<8xf32>
    %14 = vector.multi_reduction <add>, %11, %cst_8 [1] : vector<8x32xf32> to vector<8xf32>
    %15 = vector.shape_cast %14 : vector<8xf32> to vector<8x1xf32>
    %cst_9 = arith.constant 3.200000e+01 : f32
    %16 = vector.broadcast %cst_9 : f32 to vector<8x1xf32>
    %17 = arith.divf %15, %16 : vector<8x1xf32>
    %18 = arith.mulf %11, %11 : vector<8x32xf32>
    %cst_10 = arith.constant dense<0.000000e+00> : vector<8xf32>
    %19 = vector.multi_reduction <add>, %18, %cst_10 [1] : vector<8x32xf32> to vector<8xf32>
    %20 = vector.shape_cast %19 : vector<8xf32> to vector<8x1xf32>
    %cst_11 = arith.constant 3.200000e+01 : f32
    %21 = vector.broadcast %cst_11 : f32 to vector<8x1xf32>
    %22 = arith.divf %20, %21 : vector<8x1xf32>
    %23 = arith.mulf %17, %17 : vector<8x1xf32>
    %24 = arith.subf %22, %23 : vector<8x1xf32>
    %cst_12 = arith.constant 0.000000e+00 : f32
    %25 = vector.broadcast %cst_12 : f32 to vector<8x1xf32>
    %26 = arith.maximumf %24, %25 : vector<8x1xf32>
    %27 = vector.broadcast %17 : vector<8x1xf32> to vector<8x32xf32>
    %28 = arith.subf %11, %27 : vector<8x32xf32>
    %cst_13 = arith.constant 9.99999974E-6 : f32
    %29 = vector.broadcast %cst_13 : f32 to vector<8x1xf32>
    %30 = arith.addf %26, %29 : vector<8x1xf32>
    %31 = math.rsqrt %30 : vector<8x1xf32>
    %32 = vector.broadcast %31 : vector<8x1xf32> to vector<8x32xf32>
    %33 = arith.mulf %28, %32 : vector<8x32xf32>
    %34 = vector.broadcast %12 : vector<1x32xf32> to vector<8x32xf32>
    %35 = arith.mulf %33, %34 : vector<8x32xf32>
    %36 = vector.broadcast %13 : vector<1x32xf32> to vector<8x32xf32>
    %37 = arith.addf %35, %36 : vector<8x32xf32>
    %cst_14 = arith.constant 0.000000e+00 : f32
    %38 = vector.broadcast %cst_14 : f32 to vector<8x32xf32>
    %39 = arith.maximumf %37, %38 : vector<8x32xf32>
    %c0_15 = arith.constant 0 : index
    %c0_16 = arith.constant 0 : index
    %40 = vector.load %arg5[%c0_15, %c0_16] : memref<32x32xf32, #tpu.memory_space<vmem>>, vector<32x32xf32>
    %c0_17 = arith.constant 0 : index
    %c0_18 = arith.constant 0 : index
    %41 = vector.load %arg6[%c0_17, %c0_18] : memref<3x32xf32, #tpu.memory_space<vmem>>, vector<3x32xf32>
    %cst_19 = arith.constant dense<0.000000e+00> : vector<8x32xf32>
    %42 = tpu.matmul %39, %40, %cst_19 {dimension_numbers = #tpu.dot_dimension_numbers<[1], [0], [0], [1], [0, 0, 1, 1], [], []>} : vector<8x32xf32>, vector<32x32xf32>, vector<8x32xf32> -> vector<8x32xf32>
    %43 = vector.extract_strided_slice %41 {offsets = [0, 0], sizes = [1, 32], strides = [1, 1]} : vector<3x32xf32> to vector<1x32xf32>
    %44 = vector.broadcast %43 : vector<1x32xf32> to vector<8x32xf32>
    %45 = arith.addf %42, %44 : vector<8x32xf32>
    %46 = vector.extract_strided_slice %41 {offsets = [1, 0], sizes = [1, 32], strides = [1, 1]} : vector<3x32xf32> to vector<1x32xf32>
    %47 = vector.extract_strided_slice %41 {offsets = [2, 0], sizes = [1, 32], strides = [1, 1]} : vector<3x32xf32> to vector<1x32xf32>
    %cst_20 = arith.constant dense<0.000000e+00> : vector<8xf32>
    %48 = vector.multi_reduction <add>, %45, %cst_20 [1] : vector<8x32xf32> to vector<8xf32>
    %49 = vector.shape_cast %48 : vector<8xf32> to vector<8x1xf32>
    %cst_21 = arith.constant 3.200000e+01 : f32
    %50 = vector.broadcast %cst_21 : f32 to vector<8x1xf32>
    %51 = arith.divf %49, %50 : vector<8x1xf32>
    %52 = arith.mulf %45, %45 : vector<8x32xf32>
    %cst_22 = arith.constant dense<0.000000e+00> : vector<8xf32>
    %53 = vector.multi_reduction <add>, %52, %cst_22 [1] : vector<8x32xf32> to vector<8xf32>
    %54 = vector.shape_cast %53 : vector<8xf32> to vector<8x1xf32>
    %cst_23 = arith.constant 3.200000e+01 : f32
    %55 = vector.broadcast %cst_23 : f32 to vector<8x1xf32>
    %56 = arith.divf %54, %55 : vector<8x1xf32>
    %57 = arith.mulf %51, %51 : vector<8x1xf32>
    %58 = arith.subf %56, %57 : vector<8x1xf32>
    %cst_24 = arith.constant 0.000000e+00 : f32
    %59 = vector.broadcast %cst_24 : f32 to vector<8x1xf32>
    %60 = arith.maximumf %58, %59 : vector<8x1xf32>
    %61 = vector.broadcast %51 : vector<8x1xf32> to vector<8x32xf32>
    %62 = arith.subf %45, %61 : vector<8x32xf32>
    %cst_25 = arith.constant 9.99999974E-6 : f32
    %63 = vector.broadcast %cst_25 : f32 to vector<8x1xf32>
    %64 = arith.addf %60, %63 : vector<8x1xf32>
    %65 = math.rsqrt %64 : vector<8x1xf32>
    %66 = vector.broadcast %65 : vector<8x1xf32> to vector<8x32xf32>
    %67 = arith.mulf %62, %66 : vector<8x32xf32>
    %68 = vector.broadcast %46 : vector<1x32xf32> to vector<8x32xf32>
    %69 = arith.mulf %67, %68 : vector<8x32xf32>
    %70 = vector.broadcast %47 : vector<1x32xf32> to vector<8x32xf32>
    %71 = arith.addf %69, %70 : vector<8x32xf32>
    %cst_26 = arith.constant 0.000000e+00 : f32
    %72 = vector.broadcast %cst_26 : f32 to vector<8x32xf32>
    %73 = arith.maximumf %71, %72 : vector<8x32xf32>
    %c0_27 = arith.constant 0 : index
    %c0_28 = arith.constant 0 : index
    %74 = vector.load %arg7[%c0_27, %c0_28] : memref<1x32xf32, #tpu.memory_space<vmem>>, vector<1x32xf32>
    %cst_29 = arith.constant dense<0.000000e+00> : vector<1x8xf32>
    %75 = tpu.matmul %74, %73, %cst_29 {dimension_numbers = #tpu.dot_dimension_numbers<[1], [1], [0], [0], [0, 0, 1, 0], [], []>} : vector<1x32xf32>, vector<8x32xf32>, vector<1x8xf32> -> vector<1x8xf32>
    %c0_30 = arith.constant 0 : index
    %76 = memref.load %arg8[%c0_30] : memref<1xf32, #tpu.memory_space<smem>>
    %77 = vector.broadcast %76 : f32 to vector<1x8xf32>
    %78 = arith.addf %75, %77 : vector<1x8xf32>
    %c0_31 = arith.constant 0 : index
    %c0_32 = arith.constant 0 : index
    %79 = vector.load %arg9[%c0_31, %c0_32] : memref<1x8xf32, #tpu.memory_space<vmem>>, vector<1x8xf32>
    tpu.vector_store %arg9[%c0_31, %c0_32], %78 {strides = array<i32>} : memref<1x8xf32, #tpu.memory_space<vmem>>, vector<1x8xf32>,
    return
  }
  func.func @transform_0(%arg0: i32) -> (i32, i32) {
    %c0_i32 = arith.constant 0 : i32
    %c0_i32_0 = arith.constant 0 : i32
    return %arg0, %c0_i32 : i32, i32
  }
  func.func @transform_1(%arg0: i32) -> (i32, i32) {
    %c0_i32 = arith.constant 0 : i32
    %c0_i32_0 = arith.constant 0 : i32
    return %arg0, %c0_i32 : i32, i32
  }
  func.func @transform_2(%arg0: i32) -> (i32, i32) {
    %c0_i32 = arith.constant 0 : i32
    %c0_i32_0 = arith.constant 0 : i32
    %c0_i32_1 = arith.constant 0 : i32
    return %c0_i32, %c0_i32_0 : i32, i32
  }
  func.func @transform_3(%arg0: i32) -> (i32, i32) {
    %c0_i32 = arith.constant 0 : i32
    %c0_i32_0 = arith.constant 0 : i32
    %c0_i32_1 = arith.constant 0 : i32
    return %c0_i32, %c0_i32_0 : i32, i32
  }
  func.func @transform_4(%arg0: i32) -> (i32, i32) {
    %c0_i32 = arith.constant 0 : i32
    %c0_i32_0 = arith.constant 0 : i32
    %c0_i32_1 = arith.constant 0 : i32
    return %c0_i32, %c0_i32_0 : i32, i32
  }
  func.func @transform_5(%arg0: i32) -> (i32, i32) {
    %c0_i32 = arith.constant 0 : i32
    %c0_i32_0 = arith.constant 0 : i32
    %c0_i32_1 = arith.constant 0 : i32
    return %c0_i32, %c0_i32_0 : i32, i32
  }
  func.func @transform_6(%arg0: i32) -> (i32, i32) {
    %c0_i32 = arith.constant 0 : i32
    %c0_i32_0 = arith.constant 0 : i32
    %c0_i32_1 = arith.constant 0 : i32
    return %c0_i32, %c0_i32_0 : i32, i32
  }
  func.func @transform_7(%arg0: i32) -> i32 {
    %c0_i32 = arith.constant 0 : i32
    %c0_i32_0 = arith.constant 0 : i32
    return %c0_i32 : i32
  }
  func.func @transform_8(%arg0: i32) -> (i32, i32) {
    %c0_i32 = arith.constant 0 : i32
    %c0_i32_0 = arith.constant 0 : i32
    return %c0_i32, %arg0 : i32, i32
  }
}

</mosaic_0001>

<llo_original>
// kernel: tpu_custom_call.1
$region0: #{tpu_custom_call.1}
  #allocation0 [shape = 'u32[]', space=smem, size = 0x4, offset = 0x4, fixed_abs, tag = 'smem constant byte address 0x4 - core index']
  #allocation1 [shape = 'u32[144,128]{1,0:T(1,128)}', space=vmem, size = 0x12000, scoped, tag = 'internal scratch']
  #allocation2 [shape = 'f32[1]{0:T(128)S(6)}', space=smem, size = 0x200, scoped, tag = 'scoped memory for tpu_custom_call.1']
  %s0 = inlined_call_operand.hbm [shape: f32[8,16], index: 0, kind: input, shape index: {}]
  %s1 = inlined_call_operand.hbm [shape: f32[8,8], index: 1, kind: input, shape index: {}]
  %s2 = inlined_call_operand.hbm [shape: f32[24,32], index: 2, kind: input, shape index: {}]
  %s3 = inlined_call_operand.vmem [shape: f32[3,32], index: 3, kind: input, shape index: {}]
  %s4 = inlined_call_operand.hbm [shape: f32[32,32], index: 4, kind: input, shape index: {}]
  %s5 = inlined_call_operand.vmem [shape: f32[3,32], index: 5, kind: input, shape index: {}]
  %s6 = inlined_call_operand.vmem [shape: f32[1,32], index: 6, kind: input, shape index: {}]
  %s7 = inlined_call_operand.<no memory space> [shape: f32[1], index: 7, kind: input, shape index: {}]
  %s8 = inlined_call_operand.hbm [shape: f32[1,8], index: 8, kind: output, shape index: {}]
  %s9 = sld [smem:[#allocation0]]
  $region58: #{tpu_custom_call.1} parent=0
    _
  %s11 = ssub.s32 1, %s9
  %s12 = scalar_select 0, %s11, %s9
  %13 = sst [smem:[#allocation2]] %s7
  $region1: #{tpu_custom_call.1} parent=0
    #allocation3 [shape = 'u8[4096]{0}', space=vmem, size = 0x1000, scoped, tag = 'input window, operand 0, single buffered']
    #allocation4 [shape = 's32[1]{0}', space=sflag, size = 0x4, scoped, tag = 'scoped memory for tpu_custom_call.1']
    #allocation5 [shape = 's32[1]{0}', space=sflag, size = 0x4, scoped, tag = 'scoped memory for tpu_custom_call.1']
    #allocation6 [shape = 'u8[4096]{0}', space=vmem, size = 0x1000, scoped, tag = 'input window, operand 1, single buffered']
    #allocation7 [shape = 's32[1]{0}', space=sflag, size = 0x4, scoped, tag = 'scoped memory for tpu_custom_call.1']
    #allocation8 [shape = 'u8[12288]{0}', space=vmem, size = 0x3000, scoped, tag = 'input window, operand 2, single buffered']
    #allocation9 [shape = 'u8[16384]{0}', space=vmem, size = 0x4000, scoped, tag = 'input window, operand 4, single buffered']
    #allocation10 [shape = 's32[1]{0}', space=sflag, size = 0x4, scoped, tag = 'scoped memory for tpu_custom_call.1']
    #allocation11 [shape = 'u8[512]{0}', space=vmem, size = 0x400, scoped, tag = 'output window, operand 0, single buffered']
    %14 = vsyncpa [#allocation4], 0
    %15 = vsyncpa [#allocation7], 0
    %16 = vsyncpa [#allocation10], 0
    %17 = vsyncpa [#allocation5], 0
    // Predicated region
    $region2: #{tpu_custom_call.1} parent=1 // pred_check
      _
    $region3: #{tpu_custom_call.1} parent=1 // pred_check_branch
      %19 = sbr.rel (0) target = $region5
    $region4: #{tpu_custom_call.1} parent=1 // pred_region
      %s21 = ssub.s32 128, 128
      %22 = vsyncadd [#allocation4], %s21
      %s24 = sshll.u32 [#allocation3], 4
      %s25 = int_to_ptr.vmem [resolvable:$true] %s24
      %27 = dma.hbm_to_vmem [thread:$0]  %s0, 128, %s25, [#allocation4]
    $region5: #{tpu_custom_call.1} parent=1 // pred_fallthru
      _
    // Predicated region
    $region6: #{tpu_custom_call.1} parent=1 // pred_check
      _
    $region7: #{tpu_custom_call.1} parent=1 // pred_check_branch
      %29 = sbr.rel (0) target = $region9
    $region8: #{tpu_custom_call.1} parent=1 // pred_region
      %s31 = ssub.s32 128, 128
      %32 = vsyncadd [#allocation7], %s31
      %s34 = sshll.u32 [#allocation6], 4
      %s35 = int_to_ptr.vmem [resolvable:$true] %s34
      %37 = dma.hbm_to_vmem [thread:$0]  %s1, 128, %s35, [#allocation7]
    $region9: #{tpu_custom_call.1} parent=1 // pred_fallthru
      _
    // Predicated region
    $region10: #{tpu_custom_call.1} parent=1 // pred_check
      _
    $region11: #{tpu_custom_call.1} parent=1 // pred_check_branch
      %39 = sbr.rel (0) target = $region13
    $region12: #{tpu_custom_call.1} parent=1 // pred_region
      %s41 = ssub.s32 384, 384
      %42 = vsyncadd [#allocation7], %s41
      %s43 = sshll.u32 [#allocation8], 4
      %s44 = int_to_ptr.vmem [resolvable:$true] %s43
      %49 = dma.hbm_to_vmem [thread:$0]  %s2, 384, %s44, [#allocation7], 128, 128, 8
    $region13: #{tpu_custom_call.1} parent=1 // pred_fallthru
      _
    // Predicated region
    $region14: #{tpu_custom_call.1} parent=1 // pred_check
      _
    $region15: #{tpu_custom_call.1} parent=1 // pred_check_branch
      %51 = sbr.rel (0) target = $region17
    $region16: #{tpu_custom_call.1} parent=1 // pred_region
      _
    $region17: #{tpu_custom_call.1} parent=1 // pred_fallthru
      _
    // Predicated region
    $region18: #{tpu_custom_call.1} parent=1 // pred_check
      _
    $region19: #{tpu_custom_call.1} parent=1 // pred_check_branch
      %53 = sbr.rel (0) target = $region21
    $region20: #{tpu_custom_call.1} parent=1 // pred_region
      %s55 = ssub.s32 512, 512
      %56 = vsyncadd [#allocation10], %s55
      %s57 = sshll.u32 [#allocation9], 4
      %s58 = int_to_ptr.vmem [resolvable:$true] %s57
      %63 = dma.hbm_to_vmem [thread:$0]  %s4, 512, %s58, [#allocation10], 128, 128, 8
    $region21: #{tpu_custom_call.1} parent=1 // pred_fallthru
      _
    // Predicated region
    $region22: #{tpu_custom_call.1} parent=1 // pred_check
      _
    $region23: #{tpu_custom_call.1} parent=1 // pred_check_branch
      %65 = sbr.rel (0) target = $region25
    $region24: #{tpu_custom_call.1} parent=1 // pred_region
      _
    $region25: #{tpu_custom_call.1} parent=1 // pred_fallthru
      _
    // Predicated region
    $region26: #{tpu_custom_call.1} parent=1 // pred_check
      _
    $region27: #{tpu_custom_call.1} parent=1 // pred_check_branch
      %67 = sbr.rel (0) target = $region29
    $region28: #{tpu_custom_call.1} parent=1 // pred_region
      _
    $region29: #{tpu_custom_call.1} parent=1 // pred_fallthru
      _
    // Predicated region
    $region30: #{tpu_custom_call.1} parent=1 // pred_check
      _
    $region31: #{tpu_custom_call.1} parent=1 // pred_check_branch
      %69 = sbr.rel (0) target = $region33
    $region32: #{tpu_custom_call.1} parent=1 // pred_region
      _
    $region33: #{tpu_custom_call.1} parent=1 // pred_fallthru
      _
    // Predicated region
    $region34: #{tpu_custom_call.1} parent=1 // pred_check
      _
    $region35: #{tpu_custom_call.1} parent=1 // pred_check_branch
      %71 = sbr.rel (0) target = $region37
    $region36: #{tpu_custom_call.1} parent=1 // pred_region
      %72 = dma.done [#allocation4], 128
    $region37: #{tpu_custom_call.1} parent=1 // pred_fallthru
      _
    // Predicated region
    $region38: #{tpu_custom_call.1} parent=1 // pred_check
      _
    $region39: #{tpu_custom_call.1} parent=1 // pred_check_branch
      %74 = sbr.rel (0) target = $region41
    $region40: #{tpu_custom_call.1} parent=1 // pred_region
      %75 = dma.done [#allocation7], 128
    $region41: #{tpu_custom_call.1} parent=1 // pred_fallthru
      _
    // Predicated region
    $region42: #{tpu_custom_call.1} parent=1 // pred_check
      _
    $region43: #{tpu_custom_call.1} parent=1 // pred_check_branch
      %77 = sbr.rel (0) target = $region45
    $region44: #{tpu_custom_call.1} parent=1 // pred_region
      %78 = dma.done [#allocation7], 384
    $region45: #{tpu_custom_call.1} parent=1 // pred_fallthru
      _
    // Predicated region
    $region46: #{tpu_custom_call.1} parent=1 // pred_check
      _
    $region47: #{tpu_custom_call.1} parent=1 // pred_check_branch
      %80 = sbr.rel (0) target = $region49
    $region48: #{tpu_custom_call.1} parent=1 // pred_region
      %81 = dma.done [#allocation10], 512
    $region49: #{tpu_custom_call.1} parent=1 // pred_fallthru
      _
    %v82 = vld [vmem:[#allocation3] sm:$0xff]
    %v83 = vld [vmem:[#allocation6] sm:$0xff]
    %v84 = vld [vmem:[#allocation8] sm:$0xff]
    %v85 = vld [vmem:[#allocation8 + $0x8] sm:$0xff]
    %v86 = vld [vmem:[#allocation8 + $0x10] sm:$0xff]
    %v87 = vld [vmem:[%s3] sm:$0x7]
    %vm88 = vcmask 64512
    %v90 = vsel %vm88, %v83, 0
    %92 = vmatprep.subr.mxu0 0.0
    %93 = vmatpush1.msra.mxu0 %v86
    %94 = vmatprep.subr.mxu0 0.0
    %95 = vmatpush1.msra.mxu0 0.0
    %96 = vmatprep.subr.mxu0 0.0
    %97 = vmatpush1.msra.mxu0 0.0
    %98 = vmatprep.subr.mxu0 0.0
    %99 = vmatpush1.msra.mxu0 0.0
    %100 = vmatprep.subr.mxu0 0.0
    %101 = vmatpush1.msra.mxu0 0.0
    %102 = vmatprep.subr.mxu0 0.0
    %103 = vmatpush1.msra.mxu0 0.0
    %104 = vmatprep.subr.mxu0 0.0
    %105 = vmatpush1.msra.mxu0 0.0
    %106 = vmatprep.subr.mxu0 0.0
    %107 = vmatpush1.msra.mxu0 0.0
    %108 = vmatprep.subr.mxu0 0.0
    %109 = vmatpush1.msra.mxu0 0.0
    %110 = vmatprep.subr.mxu0 0.0
    %111 = vmatpush1.msra.mxu0 0.0
    %112 = vmatprep.subr.mxu0 0.0
    %113 = vmatpush1.msra.mxu0 0.0
    %114 = vmatprep.subr.mxu0 0.0
    %115 = vmatpush1.msra.mxu0 0.0
    %116 = vmatprep.subr.mxu0 0.0
    %117 = vmatpush1.msra.mxu0 0.0
    %118 = vmatprep.subr.mxu0 0.0
    %119 = vmatpush1.msra.mxu0 0.0
    %120 = vmatprep.subr.mxu0 0.0
    %121 = vmatpush1.msra.mxu0 0.0
    %122 = vmatprep.subr.mxu0 0.0
    %123 = vmatpush1.msra.mxu0 0.0
    %124 = vmatprep.subr.mxu0 0.0
    %125 = vmatpush1.msra.mxu0 0.0
    %126 = vmatprep.subr.mxu0 0.0
    %127 = vmatpush1.msra.mxu0 0.0
    %128 = vmatprep.subr.mxu0 0.0
    %129 = vmatpush1.msra.mxu0 0.0
    %130 = vmatprep.subr.mxu0 0.0
    %131 = vmatpush1.msra.mxu0 0.0
    %132 = vmatprep.subr.mxu0 0.0
    %133 = vmatpush1.msra.mxu0 0.0
    %134 = vmatprep.subr.mxu0 0.0
    %135 = vmatpush1.msra.mxu0 0.0
    %136 = vmatprep.subr.mxu0 0.0
    %137 = vmatpush1.msra.mxu0 0.0
    %138 = vmatprep.subr.mxu0 0.0
    %139 = vmatpush1.msra.mxu0 0.0
    %140 = vmatprep.subr.mxu0 0.0
    %141 = vmatpush1.msra.mxu0 0.0
    %142 = vmatprep.subr.mxu0 0.0
    %143 = vmatpush1.msra.mxu0 0.0
    %144 = vmatprep.subr.mxu0 0.0
    %145 = vmatpush1.msra.mxu0 0.0
    %146 = vmatprep.subr.mxu0 0.0
    %147 = vmatpush1.msra.mxu0 0.0
    %148 = vmatprep.subr.mxu0 0.0
    %149 = vmatpush1.msra.mxu0 0.0
    %150 = vmatprep.subr.mxu0 0.0
    %151 = vmatpush1.msra.mxu0 0.0
    %152 = vmatprep.subr.mxu0 0.0
    %153 = vmatpush1.msra.mxu0 0.0
    %154 = vmatprep.subr.mxu0 0.0
    %155 = vmatpush1.msra.mxu0 0.0
    %156 = vmatprep.mubr.f32.mxu0 0.0
    %157 = vmatmul.mubr.f32.gmra.mrb[0].mxu0 %v90
    %v158 = vpop.f32.mrb[0].mxu0
    %v159 = vadd.f32 0.0, %v158
    %v160 = vpop.f32.mrb[0].mxu0
    %161 = vdwg.mxu0
    %vm162 = vcmask 130048
    %v164 = vsel %vm162, %v82, 0
    %166 = vmatprep.subr.mxu0 0.0
    %167 = vmatpush1.msra.mxu0 %v84
    %168 = vmatprep.subr.mxu0 0.0
    %169 = vmatpush1.msra.mxu0 %v85
    %170 = vmatprep.subr.mxu0 0.0
    %171 = vmatpush1.msra.mxu0 0.0
    %172 = vmatprep.subr.mxu0 0.0
    %173 = vmatpush1.msra.mxu0 0.0
    %174 = vmatprep.subr.mxu0 0.0
    %175 = vmatpush1.msra.mxu0 0.0
    %176 = vmatprep.subr.mxu0 0.0
    %177 = vmatpush1.msra.mxu0 0.0
    %178 = vmatprep.subr.mxu0 0.0
    %179 = vmatpush1.msra.mxu0 0.0
    %180 = vmatprep.subr.mxu0 0.0
    %181 = vmatpush1.msra.mxu0 0.0
    %182 = vmatprep.subr.mxu0 0.0
    %183 = vmatpush1.msra.mxu0 0.0
    %184 = vmatprep.subr.mxu0 0.0
    %185 = vmatpush1.msra.mxu0 0.0
    %186 = vmatprep.subr.mxu0 0.0
    %187 = vmatpush1.msra.mxu0 0.0
    %188 = vmatprep.subr.mxu0 0.0
    %189 = vmatpush1.msra.mxu0 0.0
    %190 = vmatprep.subr.mxu0 0.0
    %191 = vmatpush1.msra.mxu0 0.0
    %192 = vmatprep.subr.mxu0 0.0
    %193 = vmatpush1.msra.mxu0 0.0
    %194 = vmatprep.subr.mxu0 0.0
    %195 = vmatpush1.msra.mxu0 0.0
    %196 = vmatprep.subr.mxu0 0.0
    %197 = vmatpush1.msra.mxu0 0.0
    %198 = vmatprep.subr.mxu0 0.0
    %199 = vmatpush1.msra.mxu0 0.0
    %200 = vmatprep.subr.mxu0 0.0
    %201 = vmatpush1.msra.mxu0 0.0
    %202 = vmatprep.subr.mxu0 0.0
    %203 = vmatpush1.msra.mxu0 0.0
    %204 = vmatprep.subr.mxu0 0.0
    %205 = vmatpush1.msra.mxu0 0.0
    %206 = vmatprep.subr.mxu0 0.0
    %207 = vmatpush1.msra.mxu0 0.0
    %208 = vmatprep.subr.mxu0 0.0
    %209 = vmatpush1.msra.mxu0 0.0
    %210 = vmatprep.subr.mxu0 0.0
    %211 = vmatpush1.msra.mxu0 0.0
    %212 = vmatprep.subr.mxu0 0.0
    %213 = vmatpush1.msra.mxu0 0.0
    %214 = vmatprep.subr.mxu0 0.0
    %215 = vmatpush1.msra.mxu0 0.0
    %216 = vmatprep.subr.mxu0 0.0
    %217 = vmatpush1.msra.mxu0 0.0
    %218 = vmatprep.subr.mxu0 0.0
    %219 = vmatpush1.msra.mxu0 0.0
    %220 = vmatprep.subr.mxu0 0.0
    %221 = vmatpush1.msra.mxu0 0.0
    %222 = vmatprep.subr.mxu0 0.0
    %223 = vmatpush1.msra.mxu0 0.0
    %224 = vmatprep.subr.mxu0 0.0
    %225 = vmatpush1.msra.mxu0 0.0
    %226 = vmatprep.subr.mxu0 0.0
    %227 = vmatpush1.msra.mxu0 0.0
    %228 = vmatprep.subr.mxu0 0.0
    %229 = vmatpush1.msra.mxu0 0.0
    %230 = vmatprep.mubr.f32.mxu0 0.0
    %231 = vmatmul.mubr.f32.gmra.mrb[0].mxu0 %v164
    %v232 = vpop.f32.mrb[0].mxu0
    %v233 = vadd.f32 %v159, %v232
    %v234 = vpop.f32.mrb[0].mxu0
    %235 = vdwg.mxu0
    %v236 = vlaneseq
    %v237 = vshrl.u32 %v236, 7
    %v238 = vsub.s32 0, %v237
    %v239 = vrot.slane %v87, %v238
    %v240 = vadd.f32 %v233, %v239
    %vm241 = vcmask 261120
    %v242 = vsel %vm241, %v240, 0.0
    %243 = vadd.xlane.f32.xlu0 %v242
    %v244 = vpop.xlane.xlu0 %243
    %v245 = vrcp.pop 32.0
    %v246 = vmul.f32 %v244, %v245
    %v247 = vmul.f32 %v240, %v240
    %v248 = vsel %vm241, %v247, 0.0
    %249 = vadd.xlane.f32.xlu0 %v248
    %v250 = vpop.xlane.xlu0 %249
    %v251 = vmul.f32 %v250, %v245
    %v252 = vmul.f32 %v246, %v246
    %v253 = vsub.f32 %v251, %v252
    %v254 = vmax.f32 %v253, 0.0
    %v255 = vsub.f32 %v240, %v246
    %v256 = vadd.f32 %v254, 1e-05
    %v257 = vrsqrt.pop %v256
    %v258 = vmul.f32 %v255, %v257
    %v259 = vlaneseq
    %v260 = vshrl.u32 %v259, 7
    %v261 = vsub.s32 1, %v260
    %v262 = vrot.slane %v87, %v261
    %v263 = vmul.f32 %v258, %v262
    %v264 = vlaneseq
    %v265 = vshrl.u32 %v264, 7
    %v266 = vsub.s32 2, %v265
    %v267 = vrot.slane %v87, %v266
    %v268 = vadd.f32 %v263, %v267
    %v269 = vmax.f32 %v268, 0.0
    %v270 = vld [vmem:[#allocation9] sm:$0xff]
    %v271 = vld [vmem:[#allocation9 + $0x8] sm:$0xff]
    %v272 = vld [vmem:[#allocation9 + $0x10] sm:$0xff]
    %v273 = vld [vmem:[#allocation9 + $0x18] sm:$0xff]
    %v274 = vld [vmem:[%s5] sm:$0x7]
    %v275 = vlaneseq
    %v276 = vshrl.u32 %v275, 7
    %v277 = vsub.s32 0, %v276
    %v278 = vrot.slane %v274, %v277
    %v280 = vsel %vm241, %v269, 0
    %282 = vmatprep.subr.mxu0 0.0
    %283 = vmatpush1.msra.mxu0 %v270
    %284 = vmatprep.subr.mxu0 0.0
    %285 = vmatpush1.msra.mxu0 %v271
    %286 = vmatprep.subr.mxu0 0.0
    %287 = vmatpush1.msra.mxu0 %v272
    %288 = vmatprep.subr.mxu0 0.0
    %289 = vmatpush1.msra.mxu0 %v273
    %290 = vmatprep.subr.mxu0 0.0
    %291 = vmatpush1.msra.mxu0 0.0
    %292 = vmatprep.subr.mxu0 0.0
    %293 = vmatpush1.msra.mxu0 0.0
    %294 = vmatprep.subr.mxu0 0.0
    %295 = vmatpush1.msra.mxu0 0.0
    %296 = vmatprep.subr.mxu0 0.0
    %297 = vmatpush1.msra.mxu0 0.0
    %298 = vmatprep.subr.mxu0 0.0
    %299 = vmatpush1.msra.mxu0 0.0
    %300 = vmatprep.subr.mxu0 0.0
    %301 = vmatpush1.msra.mxu0 0.0
    %302 = vmatprep.subr.mxu0 0.0
    %303 = vmatpush1.msra.mxu0 0.0
    %304 = vmatprep.subr.mxu0 0.0
    %305 = vmatpush1.msra.mxu0 0.0
    %306 = vmatprep.subr.mxu0 0.0
    %307 = vmatpush1.msra.mxu0 0.0
    %308 = vmatprep.subr.mxu0 0.0
    %309 = vmatpush1.msra.mxu0 0.0
    %310 = vmatprep.subr.mxu0 0.0
    %311 = vmatpush1.msra.mxu0 0.0
    %312 = vmatprep.subr.mxu0 0.0
    %313 = vmatpush1.msra.mxu0 0.0
    %314 = vmatprep.subr.mxu0 0.0
    %315 = vmatpush1.msra.mxu0 0.0
    %316 = vmatprep.subr.mxu0 0.0
    %317 = vmatpush1.msra.mxu0 0.0
    %318 = vmatprep.subr.mxu0 0.0
    %319 = vmatpush1.msra.mxu0 0.0
    %320 = vmatprep.subr.mxu0 0.0
    %321 = vmatpush1.msra.mxu0 0.0
    %322 = vmatprep.subr.mxu0 0.0
    %323 = vmatpush1.msra.mxu0 0.0
    %324 = vmatprep.subr.mxu0 0.0
    %325 = vmatpush1.msra.mxu0 0.0
    %326 = vmatprep.subr.mxu0 0.0
    %327 = vmatpush1.msra.mxu0 0.0
    %328 = vmatprep.subr.mxu0 0.0
    %329 = vmatpush1.msra.mxu0 0.0
    %330 = vmatprep.subr.mxu0 0.0
    %331 = vmatpush1.msra.mxu0 0.0
    %332 = vmatprep.subr.mxu0 0.0
    %333 = vmatpush1.msra.mxu0 0.0
    %334 = vmatprep.subr.mxu0 0.0
    %335 = vmatpush1.msra.mxu0 0.0
    %336 = vmatprep.subr.mxu0 0.0
    %337 = vmatpush1.msra.mxu0 0.0
    %338 = vmatprep.subr.mxu0 0.0
    %339 = vmatpush1.msra.mxu0 0.0
    %340 = vmatprep.subr.mxu0 0.0
    %341 = vmatpush1.msra.mxu0 0.0
    %342 = vmatprep.subr.mxu0 0.0
    %343 = vmatpush1.msra.mxu0 0.0
    %344 = vmatprep.subr.mxu0 0.0
    %345 = vmatpush1.msra.mxu0 0.0
    %346 = vmatprep.mubr.f32.mxu0 0.0
    %347 = vmatmul.mubr.f32.gmra.mrb[0].mxu0 %v280
    %v348 = vpop.f32.mrb[0].mxu0
    %v349 = vadd.f32 %v278, %v348
    %v350 = vpop.f32.mrb[0].mxu0
    %351 = vdwg.mxu0
    %v352 = vsel %vm241, %v349, 0.0
    %353 = vadd.xlane.f32.xlu0 %v352
    %v354 = vpop.xlane.xlu0 %353
    %v355 = vmul.f32 %v354, %v245
    %v356 = vmul.f32 %v349, %v349
    %v357 = vsel %vm241, %v356, 0.0
    %358 = vadd.xlane.f32.xlu0 %v357
    %v359 = vpop.xlane.xlu0 %358
    %v360 = vmul.f32 %v359, %v245
    %v361 = vmul.f32 %v355, %v355
    %v362 = vsub.f32 %v360, %v361
    %v363 = vmax.f32 %v362, 0.0
    %v364 = vsub.f32 %v349, %v355
    %v365 = vadd.f32 %v363, 1e-05
    %v366 = vrsqrt.pop %v365
    %v367 = vmul.f32 %v364, %v366
    %v368 = vlaneseq
    %v369 = vshrl.u32 %v368, 7
    %v370 = vsub.s32 1, %v369
    %v371 = vrot.slane %v274, %v370
    %v372 = vmul.f32 %v367, %v371
    %v373 = vlaneseq
    %v374 = vshrl.u32 %v373, 7
    %v375 = vsub.s32 2, %v374
    %v376 = vrot.slane %v274, %v375
    %v377 = vadd.f32 %v372, %v376
    %v378 = vmax.f32 %v377, 0.0
    %v379 = vld [vmem:[%s6] sm:$0x1]
    %s380 = sld [smem:[#allocation2]]
    %v381 = vstv %s380
    %v383 = vsel %vm241, %v379, 0
    %v386 = vsel %vm241, %v378, 0
    %388 = vmatprep.subr.mxu0 0.0
    %389 = vmatpush1.xpose.msra.mxu0 %v386
    %390 = vmatprep.subr.mxu0 0.0
    %391 = vmatpush1.xpose.msra.mxu0 0.0
    %392 = vmatprep.subr.mxu0 0.0
    %393 = vmatpush1.xpose.msra.mxu0 0.0
    %394 = vmatprep.subr.mxu0 0.0
    %395 = vmatpush1.xpose.msra.mxu0 0.0
    %396 = vmatprep.subr.mxu0 0.0
    %397 = vmatpush1.xpose.msra.mxu0 0.0
    %398 = vmatprep.subr.mxu0 0.0
    %399 = vmatpush1.xpose.msra.mxu0 0.0
    %400 = vmatprep.subr.mxu0 0.0
    %401 = vmatpush1.xpose.msra.mxu0 0.0
    %402 = vmatprep.subr.mxu0 0.0
    %403 = vmatpush1.xpose.msra.mxu0 0.0
    %404 = vmatprep.subr.mxu0 0.0
    %405 = vmatpush1.xpose.msra.mxu0 0.0
    %406 = vmatprep.subr.mxu0 0.0
    %407 = vmatpush1.xpose.msra.mxu0 0.0
    %408 = vmatprep.subr.mxu0 0.0
    %409 = vmatpush1.xpose.msra.mxu0 0.0
    %410 = vmatprep.subr.mxu0 0.0
    %411 = vmatpush1.xpose.msra.mxu0 0.0
    %412 = vmatprep.subr.mxu0 0.0
    %413 = vmatpush1.xpose.msra.mxu0 0.0
    %414 = vmatprep.subr.mxu0 0.0
    %415 = vmatpush1.xpose.msra.mxu0 0.0
    %416 = vmatprep.subr.mxu0 0.0
    %417 = vmatpush1.xpose.msra.mxu0 0.0
    %418 = vmatprep.subr.mxu0 0.0
    %419 = vmatpush1.xpose.msra.mxu0 0.0
    %420 = vmatprep.subr.mxu0 0.0
    %421 = vmatpush1.xpose.msra.mxu0 0.0
    %422 = vmatprep.subr.mxu0 0.0
    %423 = vmatpush1.xpose.msra.mxu0 0.0
    %424 = vmatprep.subr.mxu0 0.0
    %425 = vmatpush1.xpose.msra.mxu0 0.0
    %426 = vmatprep.subr.mxu0 0.0
    %427 = vmatpush1.xpose.msra.mxu0 0.0
    %428 = vmatprep.subr.mxu0 0.0
    %429 = vmatpush1.xpose.msra.mxu0 0.0
    %430 = vmatprep.subr.mxu0 0.0
    %431 = vmatpush1.xpose.msra.mxu0 0.0
    %432 = vmatprep.subr.mxu0 0.0
    %433 = vmatpush1.xpose.msra.mxu0 0.0
    %434 = vmatprep.subr.mxu0 0.0
    %435 = vmatpush1.xpose.msra.mxu0 0.0
    %436 = vmatprep.subr.mxu0 0.0
    %437 = vmatpush1.xpose.msra.mxu0 0.0
    %438 = vmatprep.subr.mxu0 0.0
    %439 = vmatpush1.xpose.msra.mxu0 0.0
    %440 = vmatprep.subr.mxu0 0.0
    %441 = vmatpush1.xpose.msra.mxu0 0.0
    %442 = vmatprep.subr.mxu0 0.0
    %443 = vmatpush1.xpose.msra.mxu0 0.0
    %444 = vmatprep.subr.mxu0 0.0
    %445 = vmatpush1.xpose.msra.mxu0 0.0
    %446 = vmatprep.subr.mxu0 0.0
    %447 = vmatpush1.xpose.msra.mxu0 0.0
    %448 = vmatprep.subr.mxu0 0.0
    %449 = vmatpush1.xpose.msra.mxu0 0.0
    %450 = vmatprep.subr.mxu0 0.0
    %451 = vmatpush1.xpose.msra.mxu0 0.0
    %452 = vmatprep.mubr.f32.mxu0 0.0
    %453 = vmatmul.mubr.f32.gmra.mrb[0].mxu0 %v383
    %v454 = vpop.f32.mrb[0].mxu0
    %v455 = vadd.f32 %v381, %v454
    %v456 = vpop.f32.mrb[0].mxu0
    %457 = vdwg.mxu0
    %vm458 = vcmask 57344
    %459 = vst.msk [vmem:[#allocation11] sm:$0x1] %vm458, %v455
    // Predicated region
    $region50: #{tpu_custom_call.1} parent=1 // pred_check
      _
    $region51: #{tpu_custom_call.1} parent=1 // pred_check_branch
      %461 = sbr.rel (0) target = $region53
    $region52: #{tpu_custom_call.1} parent=1 // pred_region
      %s463 = ssub.s32 16, 16
      %464 = vsyncadd [#allocation5], %s463
      %s466 = sshll.u32 [#allocation11], 4
      %s467 = int_to_ptr.vmem [resolvable:$true] %s466
      %469 = dma.vmem_to_hbm [thread:$0]  %s467, 16, %s8, [#allocation5]
    $region53: #{tpu_custom_call.1} parent=1 // pred_fallthru
      _
    // Predicated region
    $region54: #{tpu_custom_call.1} parent=1 // pred_check
      _
    $region55: #{tpu_custom_call.1} parent=1 // pred_check_branch
      %471 = sbr.rel (0) target = $region57
    $region56: #{tpu_custom_call.1} parent=1 // pred_region
      %472 = dma.done [#allocation5], 16
    $region57: #{tpu_custom_call.1} parent=1 // pred_fallthru
      _
    %473 = vsyncpa [#allocation4], 1
    %474 = vsyncpa [#allocation7], 1
    %475 = vsyncpa [#allocation10], 1
    %476 = vsyncpa [#allocation5], 1

</llo_original>
